<compile_context>
chip_gen: v7x
topology: tpu7x:2x2x1
jax: 0.10.0
libtpu: 0.0.40
codegen_flags: <defaults>
</compile_context>

<pallas_src>
import jax
import jax.numpy as jnp
from jax.experimental import pallas as pl
from jax.experimental.pallas import tpu as pltpu


def _round_up(x, m):
    return (x + m - 1) // m * m


def _pad_to(a, shape):
    pads = [(0, s - d) for d, s in zip(a.shape, shape)]
    if any(p[1] for p in pads):
        a = jnp.pad(a, pads)
    return a


def _chip_config():
    """Per-generation defaults: (row tile TM, pf tile TP, VMEM budget bytes).

    TM sets arithmetic intensity (full w1/w2 are re-streamed once per row
    tile, AI ~= TM flop/byte), so it is the main per-chip knob:
      * v5e (~240 flop/B roofline, 128 MiB VMEM) / v6e (~680 flop/B, 128 MiB):
        TM=768, TP=1024, ~100 MiB budget -> compute-bound with headroom.
      * v7x (~310 flop/B, 64 MiB VMEM): TM=512, TP=512, <=48 MiB budget so
        the compiler keeps headroom for internal scratch/semaphores.
    """
    vmem_phys = 128 << 20
    try:
        vmem_phys = int(pltpu.get_tpu_info().vmem_capacity_bytes)
    except Exception:
        pass
    if vmem_phys <= (80 << 20):          # v7x-class: 64 MiB per TensorCore.
        return 512, 512, 48 << 20
    return 768, 1024, 100 << 20          # v5e / v6e: 128 MiB per core.


def _pick_pf_tile(Pp, limit):
    """Largest multiple of 128 that is <= limit and divides Pp."""
    cand = min((max(limit, 128) // 128) * 128, Pp)
    while cand > 128 and Pp % cand:
        cand -= 128
    return cand


def ffn_kernel(x_ref, w1_ref, b1_ref, w2_ref, b2_ref, o_ref, acc_ref):
    k = pl.program_id(1)

    @pl.when(k == 0)
    def _init():
        acc_ref[...] = jnp.zeros_like(acc_ref)

    # fc1 tile: [TM, Hp] @ [Hp, TP] -> f32 on the MXU; bias + ReLU in f32.
    h = jnp.dot(x_ref[...], w1_ref[...], preferred_element_type=jnp.float32)
    h = jnp.maximum(h + b1_ref[...], 0.0)

    # dropout: identity at inference time.
    # TODO(synk): training-mode dropout via pltpu.prng_seed / prng_random_bits.

    # fc2 partial: [TM, TP] @ [TP, Hp], accumulated in the resident f32 scratch.
    acc_ref[...] += jnp.dot(h.astype(w2_ref.dtype), w2_ref[...],
                            preferred_element_type=jnp.float32)

    @pl.when(k == pl.num_programs(1) - 1)
    def _finalize():
        # b2 added exactly once, in the epilogue.
        o_ref[...] = (acc_ref[...] + b2_ref[...]).astype(o_ref.dtype)


def prepare_ffn_params(w1, b1, w2, b2, *, compute_dtype=jnp.bfloat16):
    """Pad + cast weights/biases once (hoist out of the per-call path).

    w1: [hid, pf], b1: [pf], w2: [pf, hid], b2: [hid].
    Zero padding is exact: padded rows/columns contribute nothing.
    """
    H, P = w1.shape
    # 256 alignment matches the v6e/v7x 2x256^2 MXU; fall back to 128 when the
    # extra zero padding for a small hidden dim would be significant.
    h_align = 256 if (H % 256 == 0 or H >= 1024) else 128
    Hp = _round_up(H, h_align)
    Pp = _round_up(P, 128)
    return dict(
        w1=_pad_to(w1, (Hp, Pp)).astype(compute_dtype),
        b1=_pad_to(b1.astype(jnp.float32), (Pp,)).reshape(1, Pp),
        w2=_pad_to(w2, (Pp, Hp)).astype(compute_dtype),
        b2=_pad_to(b2.astype(jnp.float32), (Hp,)).reshape(1, Hp),
        H=H, P=P, Hp=Hp, Pp=Pp, compute_dtype=compute_dtype,
    )


def positionwise_ff_prepared(x, params, *, tm=None, tp=None, vmem_budget=None):
    """x: [batch, seq, hid]; params: output of prepare_ffn_params."""
    B, S, H = x.shape
    assert H == params["H"], (H, params["H"])
    Hp, Pp = params["Hp"], params["Pp"]
    compute_dtype = params["compute_dtype"]
    out_dtype = x.dtype
    M = B * S

    def_tm, def_tp, def_vmem = _chip_config()
    tm = def_tm if tm is None else tm
    tp = def_tp if tp is None else tp
    vmem_budget = def_vmem if vmem_budget is None else vmem_budget

    TM = min(_round_up(tm, 8), _round_up(M, 8))
    # Megacore: if a single oversized row tile would leave the second
    # TensorCore idle (small-M / decode-like shapes), split the rows in two.
    if _round_up(M, TM) // TM < 2 and M > 8:
        TM = min(TM, _round_up((M + 1) // 2, 8))

    TP = _pick_pf_tile(Pp, tp)

    in_bytes = jnp.dtype(compute_dtype).itemsize
    out_bytes = jnp.dtype(out_dtype).itemsize

    def vmem_est(tm_, tp_):
        # Double-buffered input/output tiles + resident f32 accumulator.
        return (2 * (tm_ * Hp * in_bytes       # x tile
                     + Hp * tp_ * in_bytes     # w1 tile
                     + tp_ * Hp * in_bytes     # w2 tile
                     + (tp_ + Hp) * 4          # bias tiles (f32)
                     + tm_ * Hp * out_bytes)   # output tile
                + tm_ * Hp * 4)                # accumulator

    # Shrink tiles until the working set fits the per-generation VMEM budget.
    while vmem_est(TM, TP) > vmem_budget:
        if TM > 256:
            TM = _round_up(TM // 2, 8)
        elif TP > 128:
            TP = _pick_pf_tile(Pp, TP - 128)
        elif TM > 8:
            TM = _round_up(TM // 2, 8)
        else:
            break

    Mp = _round_up(M, TM)

    # Activation: skip the pad/cast round trip when already aligned / bf16.
    x2d = x.reshape(M, H)
    if x2d.dtype != compute_dtype:
        x2d = x2d.astype(compute_dtype)
    x2d = _pad_to(x2d, (Mp, Hp))

    grid = (Mp // TM, Pp // TP)

    vmem_limit = min(max(int(vmem_est(TM, TP) * 1.25) + (4 << 20), 16 << 20),
                     vmem_budget)

    # NOTE: if profiling still shows exposed weight DMA after the larger TM,
    # add pipeline_mode=pl.Buffered(3) to the w1/w2 BlockSpecs below.
    out2d = pl.pallas_call(
        ffn_kernel,
        out_shape=jax.ShapeDtypeStruct((Mp, Hp), out_dtype),
        grid=grid,
        in_specs=[
            pl.BlockSpec((TM, Hp), lambda i, k: (i, 0)),   # x row tile
            pl.BlockSpec((Hp, TP), lambda i, k: (0, k)),   # w1 pf tile
            pl.BlockSpec((1, TP), lambda i, k: (0, k)),    # b1 pf tile
            pl.BlockSpec((TP, Hp), lambda i, k: (k, 0)),   # w2 pf tile
            pl.BlockSpec((1, Hp), lambda i, k: (0, 0)),    # b2
        ],
        out_specs=pl.BlockSpec((TM, Hp), lambda i, k: (i, 0)),
        scratch_shapes=[pltpu.VMEM((TM, Hp), jnp.float32)],
        compiler_params=pltpu.CompilerParams(
            dimension_semantics=("parallel", "arbitrary"),
            vmem_limit_bytes=vmem_limit),
        cost_estimate=pl.CostEstimate(
            flops=4 * Mp * Hp * Pp,
            transcendentals=0,
            # w1/w2 are re-streamed once per row tile (Mp/TM passes).
            bytes_accessed=(Mp * Hp * in_bytes
                            + (Mp // TM) * 2 * Hp * Pp * in_bytes
                            + Mp * Hp * out_bytes
                            + (Pp + Hp) * 4)),
    )(x2d, params["w1"], params["b1"], params["w2"], params["b2"])

    return out2d[:M, :H].reshape(B, S, H)


def positionwise_ff(x, w1, b1, w2, b2, *, compute_dtype=jnp.bfloat16,
                    tm=None, tp=None):
    """Convenience wrapper.  For production, call prepare_ffn_params once and
    reuse it with positionwise_ff_prepared so the weight pad/cast HBM pass is
    not repeated on every forward call."""
    params = prepare_ffn_params(w1, b1, w2, b2, compute_dtype=compute_dtype)
    return positionwise_ff_prepared(x, params, tm=tm, tp=tp)


def init_params(key, hid_dim, pf_dim, dtype=jnp.float32):
    """Matches nn.Linear default init: U(-1/sqrt(fan_in), 1/sqrt(fan_in))."""
    k1, k2, k3, k4 = jax.random.split(key, 4)
    bound1 = 1.0 / (hid_dim ** 0.5)
    bound2 = 1.0 / (pf_dim ** 0.5)
    w1 = jax.random.uniform(k1, (hid_dim, pf_dim), dtype, -bound1, bound1)
    b1 = jax.random.uniform(k2, (pf_dim,), dtype, -bound1, bound1)
    w2 = jax.random.uniform(k3, (pf_dim, hid_dim), dtype, -bound2, bound2)
    b2 = jax.random.uniform(k4, (hid_dim,), dtype, -bound2, bound2)
    return w1, b1, w2, b2


if __name__ == "__main__":
    # Small shapes matching the module's forward (batch, seq, hid_dim).
    batch, seq, hid_dim, pf_dim = 2, 8, 32, 64
    key = jax.random.PRNGKey(0)
    kx, kp = jax.random.split(key)
    x = jax.random.normal(kx, (batch, seq, hid_dim), dtype=jnp.float32)
    w1, b1, w2, b2 = init_params(kp, hid_dim, pf_dim)

    # Pre-padded / pre-cast weights (hoisted out of the per-call path).
    params = prepare_ffn_params(w1, b1, w2, b2)
    out = jax.block_until_ready(positionwise_ff_prepared(x, params))
    ref = jnp.maximum(x @ w1 + b1, 0.0) @ w2 + b2
    assert out.shape == (batch, seq, hid_dim)
    # bf16 operands / f32 accumulation vs f32 reference -> loose tolerance.
    assert jnp.allclose(out, ref, atol=5e-2, rtol=5e-2), \
        float(jnp.max(jnp.abs(out - ref)))

    # Multi-step grid (>=2 row tiles x >=2 pf tiles): exercises the resident
    # f32 accumulator reduction and the pl.when init/finalize path.
    b2_, s2_, h2_, p2_ = 2, 16, 128, 256
    kx2, kp2 = jax.random.split(jax.random.PRNGKey(1))
    x2 = jax.random.normal(kx2, (b2_, s2_, h2_), dtype=jnp.float32)
    w1b, b1b, w2b, b2b = init_params(kp2, h2_, p2_)
    out2 = jax.block_until_ready(
        positionwise_ff(x2, w1b, b1b, w2b, b2b, tm=16, tp=128))
    ref2 = jnp.maximum(x2 @ w1b + b1b, 0.0) @ w2b + b2b
    assert out2.shape == (b2_, s2_, h2_)
    assert jnp.allclose(out2, ref2, atol=5e-2, rtol=5e-2), \
        float(jnp.max(jnp.abs(out2 - ref2)))

    print("KERNEL_OK")
</pallas_src>

<mosaic_0001>
module attributes {stable_mosaic.version = 11 : i64} {
  func.func @ffn_kernel(%arg0: i32, %arg1: i32, %arg2: memref<8x128xbf16, #tpu.memory_space<vmem>>, %arg3: memref<128x128xbf16, #tpu.memory_space<vmem>>, %arg4: memref<1x128xf32, #tpu.memory_space<vmem>>, %arg5: memref<128x128xbf16, #tpu.memory_space<vmem>>, %arg6: memref<1x128xf32, #tpu.memory_space<vmem>>, %arg7: memref<8x128xf32, #tpu.memory_space<vmem>>, %arg8: memref<8x128xf32, #tpu.memory_space<vmem>>) attributes {dimension_semantics = [#tpu.dimension_semantics<parallel>, #tpu.dimension_semantics<arbitrary>], iteration_bounds = array<i64: 2, 1>, scalar_prefetch = 0 : i64, scratch_operands = 1 : i64, tpu.core_type = #tpu.core_type<tc>, window_params = [{transform_indices = @transform_0, window_bounds = array<i64: 8, 128>}, {transform_indices = @transform_1, window_bounds = array<i64: 128, 128>}, {transform_indices = @transform_2, window_bounds = array<i64: 1, 128>}, {transform_indices = @transform_3, window_bounds = array<i64: 128, 128>}, {pipeline_mode = #tpu.pipeline_mode<synchronous>, transform_indices = @transform_4, window_bounds = array<i64: 1, 128>}, {transform_indices = @transform_5, window_bounds = array<i64: 8, 128>}]} {
    %c0_i32 = arith.constant 0 : i32
    %0 = arith.cmpi eq, %arg1, %c0_i32 : i32
    %1 = arith.extui %0 : i1 to i32
    %c0_i32_0 = arith.constant 0 : i32
    %2 = arith.cmpi ne, %1, %c0_i32_0 : i32
    scf.if %2 {
      %cst_16 = arith.constant 0.000000e+00 : f32
      %20 = vector.broadcast %cst_16 : f32 to vector<8x128xf32>
      %c0_17 = arith.constant 0 : index
      %c0_18 = arith.constant 0 : index
      %21 = vector.load %arg8[%c0_17, %c0_18] : memref<8x128xf32, #tpu.memory_space<vmem>>, vector<8x128xf32>
      tpu.vector_store %arg8[%c0_17, %c0_18], %20 {strides = array<i32>} : memref<8x128xf32, #tpu.memory_space<vmem>>, vector<8x128xf32>,
    } else {
    }
    %c0 = arith.constant 0 : index
    %c0_1 = arith.constant 0 : index
    %3 = vector.load %arg2[%c0, %c0_1] : memref<8x128xbf16, #tpu.memory_space<vmem>>, vector<8x128xbf16>
    %c0_2 = arith.constant 0 : index
    %c0_3 = arith.constant 0 : index
    %4 = vector.load %arg3[%c0_2, %c0_3] : memref<128x128xbf16, #tpu.memory_space<vmem>>, vector<128x128xbf16>
    %cst = arith.constant dense<0.000000e+00> : vector<8x128xf32>
    %5 = tpu.matmul %3, %4, %cst {dimension_numbers = #tpu.dot_dimension_numbers<[1], [0], [0], [1], [0, 0, 1, 1], [], []>} : vector<8x128xbf16>, vector<128x128xbf16>, vector<8x128xf32> -> vector<8x128xf32>
    %c0_4 = arith.constant 0 : index
    %c0_5 = arith.constant 0 : index
    %6 = vector.load %arg4[%c0_4, %c0_5] : memref<1x128xf32, #tpu.memory_space<vmem>>, vector<1x128xf32>
    %7 = vector.broadcast %6 : vector<1x128xf32> to vector<8x128xf32>
    %8 = arith.addf %5, %7 : vector<8x128xf32>
    %cst_6 = arith.constant 0.000000e+00 : f32
    %9 = vector.broadcast %cst_6 : f32 to vector<8x128xf32>
    %10 = arith.maximumf %8, %9 : vector<8x128xf32>
    %c0_7 = arith.constant 0 : index
    %c0_8 = arith.constant 0 : index
    %11 = vector.load %arg8[%c0_7, %c0_8] : memref<8x128xf32, #tpu.memory_space<vmem>>, vector<8x128xf32>
    %12 = arith.truncf %10 : vector<8x128xf32> to vector<8x128xbf16>
    %c0_9 = arith.constant 0 : index
    %c0_10 = arith.constant 0 : index
    %13 = vector.load %arg5[%c0_9, %c0_10] : memref<128x128xbf16, #tpu.memory_space<vmem>>, vector<128x128xbf16>
    %cst_11 = arith.constant dense<0.000000e+00> : vector<8x128xf32>
    %14 = tpu.matmul %12, %13, %cst_11 {dimension_numbers = #tpu.dot_dimension_numbers<[1], [0], [0], [1], [0, 0, 1, 1], [], []>} : vector<8x128xbf16>, vector<128x128xbf16>, vector<8x128xf32> -> vector<8x128xf32>
    %15 = arith.addf %11, %14 : vector<8x128xf32>
    %c0_12 = arith.constant 0 : index
    %c0_13 = arith.constant 0 : index
    %16 = vector.load %arg8[%c0_12, %c0_13] : memref<8x128xf32, #tpu.memory_space<vmem>>, vector<8x128xf32>
    tpu.vector_store %arg8[%c0_12, %c0_13], %15 {strides = array<i32>} : memref<8x128xf32, #tpu.memory_space<vmem>>, vector<8x128xf32>,
    %c0_i32_14 = arith.constant 0 : i32
    %17 = arith.cmpi eq, %arg1, %c0_i32_14 : i32
    %18 = arith.extui %17 : i1 to i32
    %c0_i32_15 = arith.constant 0 : i32
    %19 = arith.cmpi ne, %18, %c0_i32_15 : i32
    scf.if %19 {
      %c0_16 = arith.constant 0 : index
      %c0_17 = arith.constant 0 : index
      %20 = vector.load %arg8[%c0_16, %c0_17] : memref<8x128xf32, #tpu.memory_space<vmem>>, vector<8x128xf32>
      %c0_18 = arith.constant 0 : index
      %c0_19 = arith.constant 0 : index
      %21 = vector.load %arg6[%c0_18, %c0_19] : memref<1x128xf32, #tpu.memory_space<vmem>>, vector<1x128xf32>
      %22 = vector.broadcast %21 : vector<1x128xf32> to vector<8x128xf32>
      %23 = arith.addf %20, %22 : vector<8x128xf32>
      %c0_20 = arith.constant 0 : index
      %c0_21 = arith.constant 0 : index
      %24 = vector.load %arg7[%c0_20, %c0_21] : memref<8x128xf32, #tpu.memory_space<vmem>>, vector<8x128xf32>
      tpu.vector_store %arg7[%c0_20, %c0_21], %23 {strides = array<i32>} : memref<8x128xf32, #tpu.memory_space<vmem>>, vector<8x128xf32>,
    } else {
    }
    return
  }
  func.func @transform_0(%arg0: i32, %arg1: i32) -> (i32, i32) {
    %c0_i32 = arith.constant 0 : i32
    %c0_i32_0 = arith.constant 0 : i32
    return %arg0, %c0_i32 : i32, i32
  }
  func.func @transform_1(%arg0: i32, %arg1: i32) -> (i32, i32) {
    %c0_i32 = arith.constant 0 : i32
    %c0_i32_0 = arith.constant 0 : i32
    return %c0_i32, %arg1 : i32, i32
  }
  func.func @transform_2(%arg0: i32, %arg1: i32) -> (i32, i32) {
    %c0_i32 = arith.constant 0 : i32
    %c0_i32_0 = arith.constant 0 : i32
    return %c0_i32, %arg1 : i32, i32
  }
  func.func @transform_3(%arg0: i32, %arg1: i32) -> (i32, i32) {
    %c0_i32 = arith.constant 0 : i32
    %c0_i32_0 = arith.constant 0 : i32
    return %arg1, %c0_i32 : i32, i32
  }
  func.func @transform_4(%arg0: i32, %arg1: i32) -> (i32, i32) {
    %c0_i32 = arith.constant 0 : i32
    %c0_i32_0 = arith.constant 0 : i32
    %c0_i32_1 = arith.constant 0 : i32
    return %c0_i32, %c0_i32_0 : i32, i32
  }
  func.func @transform_5(%arg0: i32, %arg1: i32) -> (i32, i32) {
    %c0_i32 = arith.constant 0 : i32
    %c0_i32_0 = arith.constant 0 : i32
    return %arg0, %c0_i32 : i32, i32
  }
}

</mosaic_0001>

<llo_original>
// kernel: tpu_custom_call.1
$region0: #{tpu_custom_call.1}
  #allocation0 [shape = 'u32[]', space=smem, size = 0x4, offset = 0x4, fixed_abs, tag = 'smem constant byte address 0x4 - core index']
  #allocation1 [shape = 'u32[144,128]{1,0:T(1,128)}', space=vmem, size = 0x12000, scoped, tag = 'internal scratch']
  #allocation2 [shape = 'f32[8,128]{1,0:T(8,128)}', space=vmem, size = 0x1000, scoped, tag = 'scratch operand']
  %s0 = inlined_call_operand.hbm [shape: bf16[16,128], index: 0, kind: input, shape index: {}]
  %s1 = inlined_call_operand.hbm [shape: bf16[128,128], index: 1, kind: input, shape index: {}]
  %s2 = inlined_call_operand.vmem [shape: f32[1,128], index: 2, kind: input, shape index: {}]
  %s3 = inlined_call_operand.hbm [shape: bf16[128,128], index: 3, kind: input, shape index: {}]
  %s4 = inlined_call_operand.vmem [shape: f32[1,128], index: 4, kind: input, shape index: {}]
  %s5 = inlined_call_operand.hbm [shape: f32[16,128], index: 5, kind: output, shape index: {}]
  %s6 = sld [smem:[#allocation0]]
  $region73: #{tpu_custom_call.1} parent=0
    _
  %s8 = ssub.s32 1, %s6
  %s9 = scalar_select 0, %s8, %s6
  $region1: #{tpu_custom_call.1} parent=0
    #allocation3 [shape = 'u8[4096]{0}', space=vmem, size = 0x1000, scoped, tag = 'input window, operand 0']
    #allocation4 [shape = 's32[2]{0}', space=sflag, size = 0x8, scoped, tag = 'scoped memory for tpu_custom_call.1']
    #allocation5 [shape = 's32[2]{0}', space=sflag, size = 0x8, scoped, tag = 'scoped memory for tpu_custom_call.1']
    #allocation6 [shape = 'u8[32768]{0}', space=vmem, size = 0x8000, scoped, tag = 'input window, operand 1, single buffered']
    #allocation7 [shape = 's32[1]{0}', space=sflag, size = 0x4, scoped, tag = 'scoped memory for tpu_custom_call.1']
    #allocation8 [shape = 'u8[32768]{0}', space=vmem, size = 0x8000, scoped, tag = 'input window, operand 3, single buffered']
    #allocation9 [shape = 'u8[8192]{0}', space=vmem, size = 0x2000, scoped, tag = 'output window, operand 0']
    %10 = vsyncpa [#allocation4], 0
    %s11 = scalar_lea.sflag [#allocation4], 1
    %12 = vsyncpa %s11, 0
    %13 = vsyncpa [#allocation7], 0
    %14 = vsyncpa [#allocation5], 0
    %s15 = scalar_lea.sflag [#allocation5], 1
    %16 = vsyncpa %s15, 0
    loop: start=0, step=1, limit=4
    $region2: #{tpu_custom_call.1} parent=1 // loop_pre_header
      _
    $region3: #{tpu_custom_call.1} parent=1 // loop_header
      %s18 = sphi 0, %s22
      %p19 = scmp.ge.s32.totalorder %s18, 4
      %s25 = sphi 0, %s37
      %s26 = sphi 0, %s33
      %s27 = sphi 0, %s25
      %s28 = sphi 0, %s26
      %s29 = sphi 0, %s27
      %s30 = sphi 0, %s28
      %s40 = sphi 0, %s42
      %s43 = sphi 0, %s40
      %s44 = sphi 0, %s43
      %s60 = sphi 0, %s44
      %s66 = sphi 0, %s68
      %s69 = sphi 0, %s66
      %s70 = sphi 0, %s69
      %s86 = sphi 0, %s70
      %s92 = sphi 0, %s94
      %s95 = sphi 0, %s92
      %s96 = sphi 0, %s95
      %s112 = sphi 0, %s96
      %s118 = sphi 0, %s120
      %s121 = sphi 0, %s118
      %s122 = sphi 0, %s121
      %s138 = sphi 0, %s122
      %s142 = sphi 0, %s142
      %s144 = sphi 0, %s142
      %s145 = sphi 0, %s144
      %s159 = sphi 0, %s145
      %s165 = sphi 0, %s167
      %s168 = sphi 0, %s165
      %s169 = sphi 0, %s168
      %s185 = sphi 0, %s169
    $region4: #{tpu_custom_call.1} parent=1 // loop_header_branch
      %21 = sbr.rel (%p19) target = $region8
    $region5: #{tpu_custom_call.1} parent=1 // loop_body
      %s23 = ssub.s32 %s18, 1
      %s24 = ssub.s32 %s18, 2
      %s31 = sadd.s32 1, %s26
      %p32 = scmp.ge.s32.totalorder %s31, 1
      %s33 = scalar_select %p32, 0, %s31
      %s34 = sadd.s32 1, %s25
      %s35 = scalar_select %p32, %s34, %s25
      %p36 = scmp.ge.s32.totalorder %s35, 2
      %s37 = scalar_select %p36, 0, %s35
      %s38 = ssub.s32 %s25, %s37
      %p39 = scmp.eq.s32.totalorder %s38, 0
      %s41 = sadd.s32 %s40, 1
      %s42 = scalar_select %p39, %s40, %s41
      %p45 = pneg %p39
      %p46 = scmp.eq.s32.totalorder %s18, 1
      %p47 = por %p45, %p46
      %p48 = scmp.ne.s32.totalorder %s40, %s43
      %p49 = scmp.eq.s32.totalorder %s18, 0
      %p50 = por %p48, %p49
      %p51 = scmp.ne.s32.totalorder %s40, %s43
      %p52 = scmp.eq.s32.totalorder %s23, 1
      %p53 = por %p51, %p52
      %p54 = scmp.ne.s32.totalorder %s43, %s44
      %p55 = scmp.eq.s32.totalorder %s23, 0
      %p56 = por %p54, %p55
      %p57 = scmp.ne.s32.totalorder %s43, %s44
      %p58 = scmp.eq.s32.totalorder %s24, 1
      %p59 = por %p57, %p58
      %p61 = scmp.ne.s32.totalorder %s44, %s60
      %p62 = scmp.eq.s32.totalorder %s24, 0
      %p63 = por %p61, %p62
      %s64 = ssub.s32 %s26, %s33
      %p65 = scmp.eq.s32.totalorder %s64, 0
      %s67 = sadd.s32 %s66, 1
      %s68 = scalar_select %p65, %s66, %s67
      %p71 = pneg %p65
      %p72 = scmp.eq.s32.totalorder %s18, 1
      %p73 = por %p71, %p72
      %p74 = scmp.ne.s32.totalorder %s66, %s69
      %p75 = scmp.eq.s32.totalorder %s18, 0
      %p76 = por %p74, %p75
      %p77 = scmp.ne.s32.totalorder %s66, %s69
      %p78 = scmp.eq.s32.totalorder %s23, 1
      %p79 = por %p77, %p78
      %p80 = scmp.ne.s32.totalorder %s69, %s70
      %p81 = scmp.eq.s32.totalorder %s23, 0
      %p82 = por %p80, %p81
      %p83 = scmp.ne.s32.totalorder %s69, %s70
      %p84 = scmp.eq.s32.totalorder %s24, 1
      %p85 = por %p83, %p84
      %p87 = scmp.ne.s32.totalorder %s70, %s86
      %p88 = scmp.eq.s32.totalorder %s24, 0
      %p89 = por %p87, %p88
      %s90 = ssub.s32 %s26, %s33
      %p91 = scmp.eq.s32.totalorder %s90, 0
      %s93 = sadd.s32 %s92, 1
      %s94 = scalar_select %p91, %s92, %s93
      %p97 = pneg %p91
      %p98 = scmp.eq.s32.totalorder %s18, 1
      %p99 = por %p97, %p98
      %p100 = scmp.ne.s32.totalorder %s92, %s95
      %p101 = scmp.eq.s32.totalorder %s18, 0
      %p102 = por %p100, %p101
      %p103 = scmp.ne.s32.totalorder %s92, %s95
      %p104 = scmp.eq.s32.totalorder %s23, 1
      %p105 = por %p103, %p104
      %p106 = scmp.ne.s32.totalorder %s95, %s96
      %p107 = scmp.eq.s32.totalorder %s23, 0
      %p108 = por %p106, %p107
      %p109 = scmp.ne.s32.totalorder %s95, %s96
      %p110 = scmp.eq.s32.totalorder %s24, 1
      %p111 = por %p109, %p110
      %p113 = scmp.ne.s32.totalorder %s96, %s112
      %p114 = scmp.eq.s32.totalorder %s24, 0
      %p115 = por %p113, %p114
      %s116 = ssub.s32 %s26, %s33
      %p117 = scmp.eq.s32.totalorder %s116, 0
      %s119 = sadd.s32 %s118, 1
      %s120 = scalar_select %p117, %s118, %s119
      %p123 = pneg %p117
      %p124 = scmp.eq.s32.totalorder %s18, 1
      %p125 = por %p123, %p124
      %p126 = scmp.ne.s32.totalorder %s118, %s121
      %p127 = scmp.eq.s32.totalorder %s18, 0
      %p128 = por %p126, %p127
      %p129 = scmp.ne.s32.totalorder %s118, %s121
      %p130 = scmp.eq.s32.totalorder %s23, 1
      %p131 = por %p129, %p130
      %p132 = scmp.ne.s32.totalorder %s121, %s122
      %p133 = scmp.eq.s32.totalorder %s23, 0
      %p134 = por %p132, %p133
      %p135 = scmp.ne.s32.totalorder %s121, %s122
      %p136 = scmp.eq.s32.totalorder %s24, 1
      %p137 = por %p135, %p136
      %p139 = scmp.ne.s32.totalorder %s122, %s138
      %p140 = scmp.eq.s32.totalorder %s24, 0
      %p141 = por %p139, %p140
      %s143 = sadd.s32 %s142, 1
      %p146 = scmp.eq.s32.totalorder %s18, 1
      %p147 = scmp.ne.s32.totalorder %s142, %s144
      %p148 = scmp.eq.s32.totalorder %s18, 0
      %p149 = por %p147, %p148
      %p150 = scmp.ne.s32.totalorder %s142, %s144
      %p151 = scmp.eq.s32.totalorder %s23, 1
      %p152 = por %p150, %p151
      %p153 = scmp.ne.s32.totalorder %s144, %s145
      %p154 = scmp.eq.s32.totalorder %s23, 0
      %p155 = por %p153, %p154
      %p156 = scmp.ne.s32.totalorder %s144, %s145
      %p157 = scmp.eq.s32.totalorder %s24, 1
      %p158 = por %p156, %p157
      %p160 = scmp.ne.s32.totalorder %s145, %s159
      %p161 = scmp.eq.s32.totalorder %s24, 0
      %p162 = por %p160, %p161
      %s163 = ssub.s32 %s25, %s37
      %p164 = scmp.eq.s32.totalorder %s163, 0
      %s166 = sadd.s32 %s165, 1
      %s167 = scalar_select %p164, %s165, %s166
      %p170 = pneg %p164
      %p171 = scmp.eq.s32.totalorder %s18, 1
      %p172 = por %p170, %p171
      %p173 = scmp.ne.s32.totalorder %s165, %s168
      %p174 = scmp.eq.s32.totalorder %s18, 0
      %p175 = por %p173, %p174
      %p176 = scmp.ne.s32.totalorder %s165, %s168
      %p177 = scmp.eq.s32.totalorder %s23, 1
      %p178 = por %p176, %p177
      %p179 = scmp.ne.s32.totalorder %s168, %s169
      %p180 = scmp.eq.s32.totalorder %s23, 0
      %p181 = por %p179, %p180
      %p182 = scmp.ne.s32.totalorder %s168, %s169
      %p183 = scmp.eq.s32.totalorder %s24, 1
      %p184 = por %p182, %p183
      %p186 = scmp.ne.s32.totalorder %s169, %s185
      %p187 = scmp.eq.s32.totalorder %s24, 0
      %p188 = por %p186, %p187
      %p189 = scmp.le.s32.totalorder 1, %s18
      %p190 = scmp.lt.s32.totalorder %s18, 3
      %p191 = pnand %p189, %p190
      %p192 = pneg %p191
      // Predicated region
      $region9: #{tpu_custom_call.1} parent=5 // pred_check
        _
      $region10: #{tpu_custom_call.1} parent=5 // pred_check_branch
        %194 = sbr.rel (%p191) target = $region12
      $region11: #{tpu_custom_call.1} parent=5 // pred_region
        %s195 = ssub.s32 %s18, 1
        // Predicated region
        $region13: #{tpu_custom_call.1} parent=11 // pred_check
          %p196 = pneg %p82
        $region14: #{tpu_custom_call.1} parent=11 // pred_check_branch
          %198 = sbr.rel (%p196) target = $region16
        $region15: #{tpu_custom_call.1} parent=11 // pred_region
          %s200 = ssub.s32 1024, 1024
          %201 = vsyncadd [#allocation7], %s200
          %s202 = smul.addr %s28, 64
          %s203 = scalar_lea.hbm %s1, %s202
          %s204 = sshll.u32 [#allocation6], 4
          %s205 = int_to_ptr.vmem [resolvable:$true] %s204
          %210 = dma.hbm_to_vmem [thread:$0]  %s203, 1024, %s205, [#allocation7], 64, 64, 4
        $region16: #{tpu_custom_call.1} parent=11 // pred_fallthru
          _
        // Predicated region
        $region17: #{tpu_custom_call.1} parent=11 // pred_check
          %p211 = pneg %p108
        $region18: #{tpu_custom_call.1} parent=11 // pred_check_branch
          %213 = sbr.rel (%p211) target = $region20
        $region19: #{tpu_custom_call.1} parent=11 // pred_region
          %p214 = scmp.lt.s32.totalorder %s28, 0
          %s215 = scalar_select %p214, %s28, 0
          %s216 = scalar_lea.vmem %s2, %s215
        $region20: #{tpu_custom_call.1} parent=11 // pred_fallthru
          _
        // Predicated region
        $region21: #{tpu_custom_call.1} parent=11 // pred_check
          %p217 = pneg %p134
        $region22: #{tpu_custom_call.1} parent=11 // pred_check_branch
          %219 = sbr.rel (%p217) target = $region24
        $region23: #{tpu_custom_call.1} parent=11 // pred_region
          %s220 = smul.u32 16, %s28
          %s222 = ssub.s32 1024, 1024
          %223 = vsyncadd [#allocation7], %s222
          %s224 = smul.addr %s220, 64
          %s225 = scalar_lea.hbm %s3, %s224
          %s226 = sshll.u32 [#allocation8], 4
          %s227 = int_to_ptr.vmem [resolvable:$true] %s226
          %232 = dma.hbm_to_vmem [thread:$0]  %s225, 1024, %s227, [#allocation7], 64, 64, 4
        $region24: #{tpu_custom_call.1} parent=11 // pred_fallthru
          _
        // Predicated region
        $region25: #{tpu_custom_call.1} parent=11 // pred_check
          %p233 = pneg %p155
        $region26: #{tpu_custom_call.1} parent=11 // pred_check_branch
          %235 = sbr.rel (%p233) target = $region28
        $region27: #{tpu_custom_call.1} parent=11 // pred_region
          _
        $region28: #{tpu_custom_call.1} parent=11 // pred_fallthru
          _
      $region12: #{tpu_custom_call.1} parent=5 // pred_fallthru
        _
      %p236 = scmp.lt.s32.totalorder %s18, 2
      // Predicated region
      $region29: #{tpu_custom_call.1} parent=5 // pred_check
        %p237 = pneg %p236
      $region30: #{tpu_custom_call.1} parent=5 // pred_check_branch
        %239 = sbr.rel (%p237) target = $region32
      $region31: #{tpu_custom_call.1} parent=5 // pred_region
        // Predicated region
        $region33: #{tpu_custom_call.1} parent=31 // pred_check
          %p240 = pneg %p50
        $region34: #{tpu_custom_call.1} parent=31 // pred_check_branch
          %242 = sbr.rel (%p240) target = $region36
        $region35: #{tpu_custom_call.1} parent=31 // pred_region
          %s243 = sand.u32 %s40, 1
          %s244 = scalar_lea.sflag [#allocation4], %s243
          %s245 = sand.u32 %s40, 1
          %s246 = smul.addr %s245, 4
          %s247 = scalar_lea.vmem [#allocation3], %s246
          %s249 = ssub.s32 64, 64
          %250 = vsyncadd %s244, %s249
          %s251 = smul.addr %s25, 64
          %s252 = scalar_lea.hbm %s0, %s251
          %s254 = sshll.u32 %s247, 4
          %s255 = int_to_ptr.vmem [resolvable:$true] %s254
          %257 = dma.hbm_to_vmem [thread:$0]  %s252, 64, %s255, %s244
        $region36: #{tpu_custom_call.1} parent=31 // pred_fallthru
          _
      $region32: #{tpu_custom_call.1} parent=5 // pred_fallthru
        _
      %p258 = scmp.le.s32.totalorder 1, %s18
      %p259 = scmp.lt.s32.totalorder %s18, 3
      %p260 = pnand %p258, %p259
      %p261 = pneg %p260
      // Predicated region
      $region37: #{tpu_custom_call.1} parent=5 // pred_check
        _
      $region38: #{tpu_custom_call.1} parent=5 // pred_check_branch
        %263 = sbr.rel (%p260) target = $region40
      $region39: #{tpu_custom_call.1} parent=5 // pred_region
        %s264 = ssub.s32 %s18, 1
        %s265 = sand.u32 %s43, 1
        %s266 = scalar_lea.sflag [#allocation4], %s265
        %s267 = sand.u32 %s43, 1
        %s268 = smul.addr %s267, 4
        %s269 = scalar_lea.vmem [#allocation3], %s268
        // Predicated region
        $region41: #{tpu_custom_call.1} parent=39 // pred_check
          %p270 = pneg %p56
        $region42: #{tpu_custom_call.1} parent=39 // pred_check_branch
          %272 = sbr.rel (%p270) target = $region44
        $region43: #{tpu_custom_call.1} parent=39 // pred_region
          %273 = dma.done %s266, 64
        $region44: #{tpu_custom_call.1} parent=39 // pred_fallthru
          _
        // Predicated region
        $region45: #{tpu_custom_call.1} parent=39 // pred_check
          %p274 = pneg %p82
        $region46: #{tpu_custom_call.1} parent=39 // pred_check_branch
          %276 = sbr.rel (%p274) target = $region48
        $region47: #{tpu_custom_call.1} parent=39 // pred_region
          %277 = dma.done [#allocation7], 1024
        $region48: #{tpu_custom_call.1} parent=39 // pred_fallthru
          _
        // Predicated region
        $region49: #{tpu_custom_call.1} parent=39 // pred_check
          %p278 = pneg %p134
        $region50: #{tpu_custom_call.1} parent=39 // pred_check_branch
          %280 = sbr.rel (%p278) target = $region52
        $region51: #{tpu_custom_call.1} parent=39 // pred_region
          %281 = dma.done [#allocation7], 1024
        $region52: #{tpu_custom_call.1} parent=39 // pred_fallthru
          _
        %s282 = sand.u32 %s43, 1
        %s283 = scalar_lea.sflag [#allocation4], %s282
        %s284 = sand.u32 %s43, 1
        %s285 = smul.addr %s284, 4
        %s286 = scalar_lea.vmem [#allocation3], %s285
        %p287 = pneg %p56
        %p288 = pneg %p53
        %p289 = pneg %p82
        %p290 = pneg %p79
        %p291 = scmp.lt.s32.totalorder %s28, 0
        %s292 = scalar_select %p291, %s28, 0
        %s293 = scalar_lea.vmem %s2, %s292
        %p294 = pneg %p108
        %p295 = pneg %p105
        %p296 = pneg %p134
        %p297 = pneg %p131
        %p298 = pneg %p155
        %p299 = pneg %p152
        %p300 = pneg %p181
        %p301 = pneg %p178
        %s302 = sand.u32 %s168, 1
        %s303 = scalar_lea.sflag [#allocation5], %s302
        %s304 = sand.u32 %s168, 1
        %s305 = smul.addr %s304, 8
        %s306 = scalar_lea.vmem [#allocation9], %s305
        %p307 = scmp.lt.s32.totalorder %s28, 0
        %s308 = scalar_select %p307, %s28, 0
        %s309 = scalar_lea.vmem %s2, %s308
        %s310 = smul.u32 16, %s28
        %p312 = scmp.eq.s32.totalorder %s28, 0
        // Predicated region
        $region53: #{tpu_custom_call.1} parent=39 // pred_check
          %p313 = pneg %p312
        $region54: #{tpu_custom_call.1} parent=39 // pred_check_branch
          %315 = sbr.rel (%p313) target = $region56
        $region55: #{tpu_custom_call.1} parent=39 // pred_region
          %316 = vst [vmem:[#allocation2] sm:$0xff] 0.0
        $region56: #{tpu_custom_call.1} parent=39 // pred_fallthru
          _
        %v317 = vld [vmem:[%s269] sm:$0xf]
        %v318 = vld [vmem:[#allocation6] sm:$0xf]
        %v319 = vld [vmem:[#allocation6 + $0x4] sm:$0xf]
        %v320 = vld [vmem:[#allocation6 + $0x8] sm:$0xf]
        %v321 = vld [vmem:[#allocation6 + $0xc] sm:$0xf]
        %v322 = vld [vmem:[#allocation6 + $0x10] sm:$0xf]
        %v323 = vld [vmem:[#allocation6 + $0x14] sm:$0xf]
        %v324 = vld [vmem:[#allocation6 + $0x18] sm:$0xf]
        %v325 = vld [vmem:[#allocation6 + $0x1c] sm:$0xf]
        %v326 = vld [vmem:[#allocation6 + $0x20] sm:$0xf]
        %v327 = vld [vmem:[#allocation6 + $0x24] sm:$0xf]
        %v328 = vld [vmem:[#allocation6 + $0x28] sm:$0xf]
        %v329 = vld [vmem:[#allocation6 + $0x2c] sm:$0xf]
        %v330 = vld [vmem:[#allocation6 + $0x30] sm:$0xf]
        %v331 = vld [vmem:[#allocation6 + $0x34] sm:$0xf]
        %v332 = vld [vmem:[#allocation6 + $0x38] sm:$0xf]
        %v333 = vld [vmem:[#allocation6 + $0x3c] sm:$0xf]
        %v334 = vld [vmem:[%s309] sm:$0x1]
        %v336 = vlaneseq
        %v337 = vshrl.u32 %v336, 7
        %v338 = vsub.s32 0, %v337
        %v339 = vrot.slane %v334, %v338
        %v357 = vunpack.c.l.b16 %v318
        %v358 = vunpack.c.l.b16 %v319
        %v359 = vunpack.c.l.b16 %v320
        %v360 = vunpack.c.l.b16 %v321
        %v361 = vunpack.c.l.b16 %v322
        %v362 = vunpack.c.l.b16 %v323
        %v363 = vunpack.c.l.b16 %v324
        %v364 = vunpack.c.l.b16 %v325
        %v365 = vunpack.c.l.b16 %v326
        %v366 = vunpack.c.l.b16 %v327
        %v367 = vunpack.c.l.b16 %v328
        %v368 = vunpack.c.l.b16 %v329
        %v369 = vunpack.c.l.b16 %v330
        %v370 = vunpack.c.l.b16 %v331
        %v371 = vunpack.c.l.b16 %v332
        %v372 = vunpack.c.l.b16 %v333
        %v373 = vpack.c.b16 %v358, %v357
        %v374 = vpack.c.b16 %v360, %v359
        %v375 = vpack.c.b16 %v362, %v361
        %v376 = vpack.c.b16 %v364, %v363
        %v377 = vpack.c.b16 %v366, %v365
        %v378 = vpack.c.b16 %v368, %v367
        %v379 = vpack.c.b16 %v370, %v369
        %v380 = vpack.c.b16 %v372, %v371
        %389 = vmatprep.subr.bf16.mxu0 0
        %390 = vmatpush1.bf16.msra.mxu0 %v373
        %391 = vmatprep.subr.bf16.mxu0 0
        %392 = vmatpush1.bf16.msra.mxu0 %v374
        %393 = vmatprep.subr.bf16.mxu0 0
        %394 = vmatpush1.bf16.msra.mxu0 %v375
        %395 = vmatprep.subr.bf16.mxu0 0
        %396 = vmatpush1.bf16.msra.mxu0 %v376
        %397 = vmatprep.subr.bf16.mxu0 0
        %398 = vmatpush1.bf16.msra.mxu0 %v377
        %399 = vmatprep.subr.bf16.mxu0 0
        %400 = vmatpush1.bf16.msra.mxu0 %v378
        %401 = vmatprep.subr.bf16.mxu0 0
        %402 = vmatpush1.bf16.msra.mxu0 %v379
        %403 = vmatprep.subr.bf16.mxu0 0
        %404 = vmatpush1.bf16.msra.mxu0 %v380
        %405 = vmatprep.subr.bf16.mxu0 0
        %406 = vmatpush1.bf16.msra.mxu0 0
        %407 = vmatprep.subr.bf16.mxu0 0
        %408 = vmatpush1.bf16.msra.mxu0 0
        %409 = vmatprep.subr.bf16.mxu0 0
        %410 = vmatpush1.bf16.msra.mxu0 0
        %411 = vmatprep.subr.bf16.mxu0 0
        %412 = vmatpush1.bf16.msra.mxu0 0
        %413 = vmatprep.subr.bf16.mxu0 0
        %414 = vmatpush1.bf16.msra.mxu0 0
        %415 = vmatprep.subr.bf16.mxu0 0
        %416 = vmatpush1.bf16.msra.mxu0 0
        %417 = vmatprep.subr.bf16.mxu0 0
        %418 = vmatpush1.bf16.msra.mxu0 0
        %419 = vmatprep.subr.bf16.mxu0 0
        %420 = vmatpush1.bf16.msra.mxu0 0
        %421 = vmatprep.mubr.bf16.mxu0 0
        %422 = vmatmul.mubr.bf16.gmra.mrb[0].mxu0 %v317
        %v423 = vpop.f32.mrb[0].mxu0
        %v424 = vadd.f32 %v339, %v423
        %v425 = vpop.f32.mrb[0].mxu0
        %v426 = vpop.f32.mrb[0].mxu0
        %v427 = vpop.f32.mrb[0].mxu0
        %428 = vdwg.mxu0
        %v429 = vmax.f32 %v424, 0.0
        %v430 = vld [vmem:[#allocation2] sm:$0xff]
        %v431 = vpack.c.bf16 %v429, %v429
        %v432 = vld [vmem:[#allocation8] sm:$0xf]
        %v433 = vld [vmem:[#allocation8 + $0x4] sm:$0xf]
        %v434 = vld [vmem:[#allocation8 + $0x8] sm:$0xf]
        %v435 = vld [vmem:[#allocation8 + $0xc] sm:$0xf]
        %v436 = vld [vmem:[#allocation8 + $0x10] sm:$0xf]
        %v437 = vld [vmem:[#allocation8 + $0x14] sm:$0xf]
        %v438 = vld [vmem:[#allocation8 + $0x18] sm:$0xf]
        %v439 = vld [vmem:[#allocation8 + $0x1c] sm:$0xf]
        %v440 = vld [vmem:[#allocation8 + $0x20] sm:$0xf]
        %v441 = vld [vmem:[#allocation8 + $0x24] sm:$0xf]
        %v442 = vld [vmem:[#allocation8 + $0x28] sm:$0xf]
        %v443 = vld [vmem:[#allocation8 + $0x2c] sm:$0xf]
        %v444 = vld [vmem:[#allocation8 + $0x30] sm:$0xf]
        %v445 = vld [vmem:[#allocation8 + $0x34] sm:$0xf]
        %v446 = vld [vmem:[#allocation8 + $0x38] sm:$0xf]
        %v447 = vld [vmem:[#allocation8 + $0x3c] sm:$0xf]
        %v464 = vunpack.c.l.b16 %v432
        %v465 = vunpack.c.l.b16 %v433
        %v466 = vunpack.c.l.b16 %v434
        %v467 = vunpack.c.l.b16 %v435
        %v468 = vunpack.c.l.b16 %v436
        %v469 = vunpack.c.l.b16 %v437
        %v470 = vunpack.c.l.b16 %v438
        %v471 = vunpack.c.l.b16 %v439
        %v472 = vunpack.c.l.b16 %v440
        %v473 = vunpack.c.l.b16 %v441
        %v474 = vunpack.c.l.b16 %v442
        %v475 = vunpack.c.l.b16 %v443
        %v476 = vunpack.c.l.b16 %v444
        %v477 = vunpack.c.l.b16 %v445
        %v478 = vunpack.c.l.b16 %v446
        %v479 = vunpack.c.l.b16 %v447
        %v480 = vpack.c.b16 %v465, %v464
        %v481 = vpack.c.b16 %v467, %v466
        %v482 = vpack.c.b16 %v469, %v468
        %v483 = vpack.c.b16 %v471, %v470
        %v484 = vpack.c.b16 %v473, %v472
        %v485 = vpack.c.b16 %v475, %v474
        %v486 = vpack.c.b16 %v477, %v476
        %v487 = vpack.c.b16 %v479, %v478
        %496 = vmatprep.subr.bf16.mxu0 0
        %497 = vmatpush1.bf16.msra.mxu0 %v480
        %498 = vmatprep.subr.bf16.mxu0 0
        %499 = vmatpush1.bf16.msra.mxu0 %v481
        %500 = vmatprep.subr.bf16.mxu0 0
        %501 = vmatpush1.bf16.msra.mxu0 %v482
        %502 = vmatprep.subr.bf16.mxu0 0
        %503 = vmatpush1.bf16.msra.mxu0 %v483
        %504 = vmatprep.subr.bf16.mxu0 0
        %505 = vmatpush1.bf16.msra.mxu0 %v484
        %506 = vmatprep.subr.bf16.mxu0 0
        %507 = vmatpush1.bf16.msra.mxu0 %v485
        %508 = vmatprep.subr.bf16.mxu0 0
        %509 = vmatpush1.bf16.msra.mxu0 %v486
        %510 = vmatprep.subr.bf16.mxu0 0
        %511 = vmatpush1.bf16.msra.mxu0 %v487
        %512 = vmatprep.subr.bf16.mxu0 0
        %513 = vmatpush1.bf16.msra.mxu0 0
        %514 = vmatprep.subr.bf16.mxu0 0
        %515 = vmatpush1.bf16.msra.mxu0 0
        %516 = vmatprep.subr.bf16.mxu0 0
        %517 = vmatpush1.bf16.msra.mxu0 0
        %518 = vmatprep.subr.bf16.mxu0 0
        %519 = vmatpush1.bf16.msra.mxu0 0
        %520 = vmatprep.subr.bf16.mxu0 0
        %521 = vmatpush1.bf16.msra.mxu0 0
        %522 = vmatprep.subr.bf16.mxu0 0
        %523 = vmatpush1.bf16.msra.mxu0 0
        %524 = vmatprep.subr.bf16.mxu0 0
        %525 = vmatpush1.bf16.msra.mxu0 0
        %526 = vmatprep.subr.bf16.mxu0 0
        %527 = vmatpush1.bf16.msra.mxu0 0
        %528 = vmatprep.mubr.bf16.mxu0 0
        %529 = vmatmul.mubr.bf16.gmra.mrb[0].mxu0 %v431
        %v530 = vpop.f32.mrb[0].mxu0
        %v531 = vadd.f32 0.0, %v530
        %v532 = vpop.f32.mrb[0].mxu0
        %v533 = vpop.f32.mrb[0].mxu0
        %v534 = vpop.f32.mrb[0].mxu0
        %535 = vdwg.mxu0
        %v536 = vadd.f32 %v430, %v531
        %537 = vst [vmem:[#allocation2] sm:$0xff] %v536
        // Predicated region
        $region57: #{tpu_custom_call.1} parent=39 // pred_check
          %p538 = pneg %p312
        $region58: #{tpu_custom_call.1} parent=39 // pred_check_branch
          %540 = sbr.rel (%p538) target = $region60
        $region59: #{tpu_custom_call.1} parent=39 // pred_region
          %v541 = vld [vmem:[#allocation2] sm:$0xff]
          %v542 = vld [vmem:[%s4] sm:$0x1]
          %v544 = vlaneseq
          %v545 = vshrl.u32 %v544, 7
          %v546 = vsub.s32 0, %v545
          %v547 = vrot.slane %v542, %v546
          %v549 = vadd.f32 %v541, %v547
          %550 = vst [vmem:[%s306] sm:$0xff] %v549
        $region60: #{tpu_custom_call.1} parent=39 // pred_fallthru
          _
        %s551 = sand.u32 %s168, 1
        %s552 = scalar_lea.sflag [#allocation5], %s551
        %s553 = sand.u32 %s168, 1
        %s554 = smul.addr %s553, 8
        %s555 = scalar_lea.vmem [#allocation9], %s554
        // Predicated region
        $region61: #{tpu_custom_call.1} parent=39 // pred_check
          %p556 = pneg %p178
        $region62: #{tpu_custom_call.1} parent=39 // pred_check_branch
          %558 = sbr.rel (%p556) target = $region64
        $region63: #{tpu_custom_call.1} parent=39 // pred_region
          %s560 = ssub.s32 128, 128
          %561 = vsyncadd %s552, %s560
          %s562 = smul.addr %s27, 128
          %s563 = scalar_lea.hbm %s5, %s562
          %s565 = sshll.u32 %s555, 4
          %s566 = int_to_ptr.vmem [resolvable:$true] %s565
          %568 = dma.vmem_to_hbm [thread:$0]  %s566, 128, %s563, %s552
        $region64: #{tpu_custom_call.1} parent=39 // pred_fallthru
          _
      $region40: #{tpu_custom_call.1} parent=5 // pred_fallthru
        _
      %p569 = scmp.le.s32.totalorder 2, %s18
      // Predicated region
      $region65: #{tpu_custom_call.1} parent=5 // pred_check
        %p570 = pneg %p569
      $region66: #{tpu_custom_call.1} parent=5 // pred_check_branch
        %572 = sbr.rel (%p570) target = $region68
      $region67: #{tpu_custom_call.1} parent=5 // pred_region
        %s573 = ssub.s32 %s18, 2
        // Predicated region
        $region69: #{tpu_custom_call.1} parent=67 // pred_check
          %p574 = pneg %p184
        $region70: #{tpu_custom_call.1} parent=67 // pred_check_branch
          %576 = sbr.rel (%p574) target = $region72
        $region71: #{tpu_custom_call.1} parent=67 // pred_region
          %s577 = sand.u32 %s169, 1
          %s578 = scalar_lea.sflag [#allocation5], %s577
          %s579 = sand.u32 %s169, 1
          %s580 = smul.addr %s579, 8
          %s581 = scalar_lea.vmem [#allocation9], %s580
          %582 = dma.done %s578, 128
        $region72: #{tpu_custom_call.1} parent=67 // pred_fallthru
          _
      $region68: #{tpu_custom_call.1} parent=5 // pred_fallthru
        _
    $region6: #{tpu_custom_call.1} parent=1 // loop_footer
      %s22 = sadd.s32 1, %s18
    $region7: #{tpu_custom_call.1} parent=1 // loop_footer_branch
      %17 = sbr.rel target = $region3
    $region8: #{tpu_custom_call.1} parent=1 // loop_exit
      _
    %583 = vsyncpa [#allocation4], 1
    %s584 = scalar_lea.sflag [#allocation4], 1
    %585 = vsyncpa %s584, 1
    %586 = vsyncpa [#allocation7], 1
    %587 = vsyncpa [#allocation5], 1
    %s588 = scalar_lea.sflag [#allocation5], 1
    %589 = vsyncpa %s588, 1

</llo_original>
